<compile_context>
chip_gen: v7x
topology: tpu7x:2x2x1
jax: 0.10.0
libtpu: 0.0.40
codegen_flags: <defaults>
</compile_context>

<pallas_src>
import jax
import jax.numpy as jnp
from jax.experimental import pallas as pl
from jax.experimental.pallas import tpu as pltpu


def _round_up(x, m):
    return ((x + m - 1) // m) * m


def _choose_tb(B, tb_max=4096):
    """Batch tile: <= tb_max rows, multiple of 8; when B permits, pick an even
    number of grid steps (>=2) so v7x's 2 TensorCores both get work and the
    BlockSpec pipeline has something to overlap."""
    B8 = _round_up(B, 8)
    if B8 <= 16:  # can't give each of 2 steps >= 8 rows -> single tile
        return B8
    steps = max(2, pl.cdiv(B8, tb_max))
    if steps % 2:
        steps += 1
    return min(tb_max, _round_up(pl.cdiv(B8, steps), 8))


def _mlp_kernel(x_ref, w1_ref, b1_ref, w2_ref, b2_ref, w3_ref, b3_ref, o_ref):
    # Cast x to the MXU operand dtype in-kernel (free VPU work; avoids a wrapper
    # astype pass that would double the x HBM traffic).
    x = x_ref[...].astype(w1_ref.dtype)
    # Layer 1: MXU matmul with f32 accumulation; bias + ReLU in f32.
    h1 = jnp.dot(x, w1_ref[...], preferred_element_type=jnp.float32)
    h1 = jnp.maximum(h1 + b1_ref[...], 0.0)
    # Layer 2: cast activation down only for the MXU operand; sigmoid (EUP) in f32.
    h2 = jnp.dot(h1.astype(w2_ref.dtype), w2_ref[...], preferred_element_type=jnp.float32)
    h2 = jax.nn.sigmoid(h2 + b2_ref[...])
    # Predict layer: unpadded (TB, n_out) output block -> writes only real bytes.
    out = jnp.dot(h2.astype(w3_ref.dtype), w3_ref[...], preferred_element_type=jnp.float32)
    o_ref[...] = (out + b3_ref[...]).astype(o_ref.dtype)


def prepare_params(params, compute_dtype=jnp.bfloat16):
    """One-time cast at init: weights -> compute_dtype (MXU operands), biases -> f32.

    bf16 operands are the fast MXU path on v5e, v6e and v7x alike; pass
    compute_dtype=jnp.float32 for an exact f32 path.  Doing this once here keeps
    per-call XLA ops (and their HBM round-trips) out of the forward pass.
    """
    return dict(
        w1=params["w1"].astype(compute_dtype),
        w2=params["w2"].astype(compute_dtype),
        w3=params["w3"].astype(compute_dtype),
        b1=params["b1"].astype(jnp.float32),
        b2=params["b2"].astype(jnp.float32),
        b3=params["b3"].astype(jnp.float32),
    )


def mlp_forward(x, params, *, tb=4096):
    """x: [B, n_input] (any float dtype; cast to the weight dtype inside the kernel).

    params: dict w1,b1,w2,b2,w3,b3 with weights [in, out], biases [1, out].
    Weight dtype = MXU operand dtype (use `prepare_params` to cast once at init);
    accumulation and all elementwise math are f32; output is f32.
    """
    w1, b1, w2, b2, w3, b3 = (params[k] for k in ("w1", "b1", "w2", "b2", "w3", "b3"))
    B, n_in = x.shape
    n_h = w1.shape[1]
    n_h2 = w2.shape[1]
    n_out = w3.shape[1]

    TB = _choose_tb(B, tb)
    grid = (pl.cdiv(B, TB),)

    resident = lambda shape: pl.BlockSpec(shape, lambda i: (0, 0))  # VMEM-resident params

    flops = 2 * B * (n_in * n_h + n_h * n_h2 + n_h2 * n_out)
    bytes_accessed = int(
        x.size * x.dtype.itemsize
        + B * n_out * 4
        + sum(a.size * a.dtype.itemsize for a in (w1, w2, w3, b1, b2, b3))
    )

    return pl.pallas_call(
        _mlp_kernel,
        out_shape=jax.ShapeDtypeStruct((B, n_out), jnp.float32),
        grid=grid,
        in_specs=[
            pl.BlockSpec((TB, n_in), lambda i: (i, 0)),
            resident(w1.shape), resident(b1.shape),
            resident(w2.shape), resident(b2.shape),
            resident(w3.shape), resident(b3.shape),
        ],
        # Last dim == full array dim, so the (8,128) rule does not trigger and the
        # HBM writeback is exactly the real n_out columns (no padding, no slice pass).
        out_specs=pl.BlockSpec((TB, n_out), lambda i: (i, 0)),
        compiler_params=pltpu.CompilerParams(
            dimension_semantics=("parallel",),  # batch axis -> shard over v7x's 2 TCs
        ),
        cost_estimate=pl.CostEstimate(
            flops=int(flops),
            transcendentals=int(B * n_h2),
            bytes_accessed=bytes_accessed,
        ),
    )(x, w1, b1, w2, b2, w3, b3)


def init_params(key, n_input, n_hidden, n_output, dtype=jnp.float32):
    """Deterministic init mimicking PyTorch Linear default: U(-1/sqrt(fan_in), 1/sqrt(fan_in))."""
    def linear(k, fan_in, fan_out):
        kw, kb = jax.random.split(k)
        bound = 1.0 / jnp.sqrt(jnp.asarray(fan_in, dtype))
        w = jax.random.uniform(kw, (fan_in, fan_out), dtype, -bound, bound)
        b = jax.random.uniform(kb, (1, fan_out), dtype, -bound, bound)
        return w, b

    k1, k2, k3 = jax.random.split(key, 3)
    w1, b1 = linear(k1, n_input, n_hidden)
    w2, b2 = linear(k2, n_hidden, n_hidden // 2)
    w3, b3 = linear(k3, n_hidden // 2, n_output)
    return dict(w1=w1, b1=b1, w2=w2, b2=b2, w3=w3, b3=b3)


def reference_forward(x, params, compute_dtype=jnp.float32):
    """Pure-JAX reference with the same operand-precision policy as the kernel."""
    w1, w2, w3 = (params[k].astype(compute_dtype) for k in ("w1", "w2", "w3"))
    b1, b2, b3 = (params[k].astype(jnp.float32) for k in ("b1", "b2", "b3"))
    xc = x.astype(compute_dtype)
    h1 = jnp.maximum(jnp.dot(xc, w1, preferred_element_type=jnp.float32) + b1, 0.0)
    h2 = jax.nn.sigmoid(
        jnp.dot(h1.astype(compute_dtype), w2, preferred_element_type=jnp.float32) + b2)
    return jnp.dot(h2.astype(compute_dtype), w3, preferred_element_type=jnp.float32) + b3


if __name__ == "__main__":
    # Shapes consistent with the module: Net(n_input=16, n_hidden=32, n_output=4)
    B, n_input, n_hidden, n_output = 8, 16, 32, 4

    key = jax.random.PRNGKey(0)
    kx, kp, kx2 = jax.random.split(key, 3)
    x = jax.random.normal(kx, (B, n_input), jnp.float32)
    params = init_params(kp, n_input, n_hidden, n_output)

    # 1) Exact f32 path (raw f32 params == prepare_params(..., f32)).
    out_f32 = jax.block_until_ready(mlp_forward(x, params))
    ref_f32 = reference_forward(x, params, jnp.float32)
    assert out_f32.shape == (B, n_output), out_f32.shape
    assert jnp.allclose(out_f32, ref_f32, atol=1e-5, rtol=1e-5), "f32 mismatch vs reference"

    # 2) bf16 MXU-operand fast path (f32 accumulation), casts hoisted to init time.
    params_bf16 = prepare_params(params, jnp.bfloat16)
    out_bf16 = jax.block_until_ready(mlp_forward(x, params_bf16))
    ref_bf16 = reference_forward(x, params, jnp.bfloat16)
    assert jnp.allclose(out_bf16, ref_bf16, atol=1e-2, rtol=1e-2), "bf16 mismatch vs bf16 ref"
    assert jnp.allclose(out_bf16, ref_f32, atol=5e-2, rtol=5e-2), "bf16 drift vs f32 model"

    # 3) Multi-tile batch grid (B=1024 -> TB=512, grid=(2,)) to exercise the
    #    streaming pipeline and the v7x-friendly even grid split.
    xb = jax.random.normal(kx2, (1024, n_input), jnp.float32)
    out_big = jax.block_until_ready(mlp_forward(xb, params_bf16))
    ref_big = reference_forward(xb, params, jnp.bfloat16)
    assert out_big.shape == (1024, n_output), out_big.shape
    assert jnp.allclose(out_big, ref_big, atol=1e-2, rtol=1e-2), "multi-tile mismatch"

    print("KERNEL_OK")
</pallas_src>

<mosaic_0001>
module attributes {stable_mosaic.version = 11 : i64} {
  func.func @_mlp_kernel(%arg0: i32, %arg1: memref<8x16xf32, #tpu.memory_space<vmem>>, %arg2: memref<16x32xf32, #tpu.memory_space<vmem>>, %arg3: memref<1x32xf32, #tpu.memory_space<vmem>>, %arg4: memref<32x16xf32, #tpu.memory_space<vmem>>, %arg5: memref<1x16xf32, #tpu.memory_space<vmem>>, %arg6: memref<16x4xf32, #tpu.memory_space<vmem>>, %arg7: memref<1x4xf32, #tpu.memory_space<vmem>>, %arg8: memref<8x4xf32, #tpu.memory_space<vmem>>) attributes {dimension_semantics = [#tpu.dimension_semantics<parallel>], iteration_bounds = array<i64: 1>, scalar_prefetch = 0 : i64, scratch_operands = 0 : i64, tpu.core_type = #tpu.core_type<tc>, window_params = [{transform_indices = @transform_0, window_bounds = array<i64: 8, 16>}, {pipeline_mode = #tpu.pipeline_mode<synchronous>, transform_indices = @transform_1, window_bounds = array<i64: 16, 32>}, {pipeline_mode = #tpu.pipeline_mode<synchronous>, transform_indices = @transform_2, window_bounds = array<i64: 1, 32>}, {pipeline_mode = #tpu.pipeline_mode<synchronous>, transform_indices = @transform_3, window_bounds = array<i64: 32, 16>}, {pipeline_mode = #tpu.pipeline_mode<synchronous>, transform_indices = @transform_4, window_bounds = array<i64: 1, 16>}, {pipeline_mode = #tpu.pipeline_mode<synchronous>, transform_indices = @transform_5, window_bounds = array<i64: 16, 4>}, {pipeline_mode = #tpu.pipeline_mode<synchronous>, transform_indices = @transform_6, window_bounds = array<i64: 1, 4>}, {transform_indices = @transform_7, window_bounds = array<i64: 8, 4>}]} {
    %c0 = arith.constant 0 : index
    %c0_0 = arith.constant 0 : index
    %0 = vector.load %arg1[%c0, %c0_0] : memref<8x16xf32, #tpu.memory_space<vmem>>, vector<8x16xf32>
    %c0_1 = arith.constant 0 : index
    %c0_2 = arith.constant 0 : index
    %1 = vector.load %arg2[%c0_1, %c0_2] : memref<16x32xf32, #tpu.memory_space<vmem>>, vector<16x32xf32>
    %cst = arith.constant dense<0.000000e+00> : vector<8x32xf32>
    %2 = tpu.matmul %0, %1, %cst {dimension_numbers = #tpu.dot_dimension_numbers<[1], [0], [0], [1], [0, 0, 1, 1], [], []>} : vector<8x16xf32>, vector<16x32xf32>, vector<8x32xf32> -> vector<8x32xf32>
    %c0_3 = arith.constant 0 : index
    %c0_4 = arith.constant 0 : index
    %3 = vector.load %arg3[%c0_3, %c0_4] : memref<1x32xf32, #tpu.memory_space<vmem>>, vector<1x32xf32>
    %4 = vector.broadcast %3 : vector<1x32xf32> to vector<8x32xf32>
    %5 = arith.addf %2, %4 : vector<8x32xf32>
    %cst_5 = arith.constant 0.000000e+00 : f32
    %6 = vector.broadcast %cst_5 : f32 to vector<8x32xf32>
    %7 = arith.maximumf %5, %6 : vector<8x32xf32>
    %c0_6 = arith.constant 0 : index
    %c0_7 = arith.constant 0 : index
    %8 = vector.load %arg4[%c0_6, %c0_7] : memref<32x16xf32, #tpu.memory_space<vmem>>, vector<32x16xf32>
    %cst_8 = arith.constant dense<0.000000e+00> : vector<8x16xf32>
    %9 = tpu.matmul %7, %8, %cst_8 {dimension_numbers = #tpu.dot_dimension_numbers<[1], [0], [0], [1], [0, 0, 1, 1], [], []>} : vector<8x32xf32>, vector<32x16xf32>, vector<8x16xf32> -> vector<8x16xf32>
    %c0_9 = arith.constant 0 : index
    %c0_10 = arith.constant 0 : index
    %10 = vector.load %arg5[%c0_9, %c0_10] : memref<1x16xf32, #tpu.memory_space<vmem>>, vector<1x16xf32>
    %11 = vector.broadcast %10 : vector<1x16xf32> to vector<8x16xf32>
    %12 = arith.addf %9, %11 : vector<8x16xf32>
    %13 = arith.negf %12 : vector<8x16xf32>
    %14 = math.exp %13 : vector<8x16xf32>
    %cst_11 = arith.constant 1.000000e+00 : f32
    %15 = vector.broadcast %cst_11 : f32 to vector<8x16xf32>
    %16 = arith.addf %15, %14 : vector<8x16xf32>
    %17 = arith.divf %15, %16 : vector<8x16xf32>
    %c0_12 = arith.constant 0 : index
    %c0_13 = arith.constant 0 : index
    %18 = vector.load %arg6[%c0_12, %c0_13] : memref<16x4xf32, #tpu.memory_space<vmem>>, vector<16x4xf32>
    %cst_14 = arith.constant dense<0.000000e+00> : vector<8x4xf32>
    %19 = tpu.matmul %17, %18, %cst_14 {dimension_numbers = #tpu.dot_dimension_numbers<[1], [0], [0], [1], [0, 0, 1, 1], [], []>} : vector<8x16xf32>, vector<16x4xf32>, vector<8x4xf32> -> vector<8x4xf32>
    %c0_15 = arith.constant 0 : index
    %c0_16 = arith.constant 0 : index
    %20 = vector.load %arg7[%c0_15, %c0_16] : memref<1x4xf32, #tpu.memory_space<vmem>>, vector<1x4xf32>
    %21 = vector.broadcast %20 : vector<1x4xf32> to vector<8x4xf32>
    %22 = arith.addf %19, %21 : vector<8x4xf32>
    %c0_17 = arith.constant 0 : index
    %c0_18 = arith.constant 0 : index
    %23 = vector.load %arg8[%c0_17, %c0_18] : memref<8x4xf32, #tpu.memory_space<vmem>>, vector<8x4xf32>
    tpu.vector_store %arg8[%c0_17, %c0_18], %22 {strides = array<i32>} : memref<8x4xf32, #tpu.memory_space<vmem>>, vector<8x4xf32>,
    return
  }
  func.func @transform_0(%arg0: i32) -> (i32, i32) {
    %c0_i32 = arith.constant 0 : i32
    %c0_i32_0 = arith.constant 0 : i32
    return %arg0, %c0_i32 : i32, i32
  }
  func.func @transform_1(%arg0: i32) -> (i32, i32) {
    %c0_i32 = arith.constant 0 : i32
    %c0_i32_0 = arith.constant 0 : i32
    %c0_i32_1 = arith.constant 0 : i32
    return %c0_i32, %c0_i32_0 : i32, i32
  }
  func.func @transform_2(%arg0: i32) -> (i32, i32) {
    %c0_i32 = arith.constant 0 : i32
    %c0_i32_0 = arith.constant 0 : i32
    %c0_i32_1 = arith.constant 0 : i32
    return %c0_i32, %c0_i32_0 : i32, i32
  }
  func.func @transform_3(%arg0: i32) -> (i32, i32) {
    %c0_i32 = arith.constant 0 : i32
    %c0_i32_0 = arith.constant 0 : i32
    %c0_i32_1 = arith.constant 0 : i32
    return %c0_i32, %c0_i32_0 : i32, i32
  }
  func.func @transform_4(%arg0: i32) -> (i32, i32) {
    %c0_i32 = arith.constant 0 : i32
    %c0_i32_0 = arith.constant 0 : i32
    %c0_i32_1 = arith.constant 0 : i32
    return %c0_i32, %c0_i32_0 : i32, i32
  }
  func.func @transform_5(%arg0: i32) -> (i32, i32) {
    %c0_i32 = arith.constant 0 : i32
    %c0_i32_0 = arith.constant 0 : i32
    %c0_i32_1 = arith.constant 0 : i32
    return %c0_i32, %c0_i32_0 : i32, i32
  }
  func.func @transform_6(%arg0: i32) -> (i32, i32) {
    %c0_i32 = arith.constant 0 : i32
    %c0_i32_0 = arith.constant 0 : i32
    %c0_i32_1 = arith.constant 0 : i32
    return %c0_i32, %c0_i32_0 : i32, i32
  }
  func.func @transform_7(%arg0: i32) -> (i32, i32) {
    %c0_i32 = arith.constant 0 : i32
    %c0_i32_0 = arith.constant 0 : i32
    return %arg0, %c0_i32 : i32, i32
  }
}

</mosaic_0001>

<llo_original>
// kernel: tpu_custom_call.1
$region0: #{tpu_custom_call.1}
  #allocation0 [shape = 'u32[]', space=smem, size = 0x4, offset = 0x4, fixed_abs, tag = 'smem constant byte address 0x4 - core index']
  #allocation1 [shape = 'u32[144,128]{1,0:T(1,128)}', space=vmem, size = 0x12000, scoped, tag = 'internal scratch']
  %s0 = inlined_call_operand.vmem [shape: f32[8,16], index: 0, kind: input, shape index: {}]
  %s1 = inlined_call_operand.vmem [shape: f32[16,32], index: 1, kind: input, shape index: {}]
  %s2 = inlined_call_operand.vmem [shape: f32[1,32], index: 2, kind: input, shape index: {}]
  %s3 = inlined_call_operand.vmem [shape: f32[32,16], index: 3, kind: input, shape index: {}]
  %s4 = inlined_call_operand.vmem [shape: f32[1,16], index: 4, kind: input, shape index: {}]
  %s5 = inlined_call_operand.vmem [shape: f32[16,4], index: 5, kind: input, shape index: {}]
  %s6 = inlined_call_operand.vmem [shape: f32[1,4], index: 6, kind: input, shape index: {}]
  %s7 = inlined_call_operand.vmem [shape: f32[8,4], index: 7, kind: output, shape index: {}]
  %s8 = sld [smem:[#allocation0]]
  $region38: #{tpu_custom_call.1} parent=0
    _
  %s10 = ssub.s32 1, %s8
  %s11 = scalar_select 0, %s10, %s8
  // Predicated region
  $region2: #{tpu_custom_call.1} parent=0 // pred_check
    _
  $region3: #{tpu_custom_call.1} parent=0 // pred_check_branch
    %13 = sbr.rel (0) target = $region5
  $region4: #{tpu_custom_call.1} parent=0 // pred_region
    _
  $region5: #{tpu_custom_call.1} parent=0 // pred_fallthru
    _
  // Predicated region
  $region6: #{tpu_custom_call.1} parent=0 // pred_check
    _
  $region7: #{tpu_custom_call.1} parent=0 // pred_check_branch
    %15 = sbr.rel (0) target = $region9
  $region8: #{tpu_custom_call.1} parent=0 // pred_region
    _
  $region9: #{tpu_custom_call.1} parent=0 // pred_fallthru
    _
  // Predicated region
  $region10: #{tpu_custom_call.1} parent=0 // pred_check
    _
  $region11: #{tpu_custom_call.1} parent=0 // pred_check_branch
    %17 = sbr.rel (0) target = $region13
  $region12: #{tpu_custom_call.1} parent=0 // pred_region
    _
  $region13: #{tpu_custom_call.1} parent=0 // pred_fallthru
    _
  // Predicated region
  $region14: #{tpu_custom_call.1} parent=0 // pred_check
    _
  $region15: #{tpu_custom_call.1} parent=0 // pred_check_branch
    %19 = sbr.rel (0) target = $region17
  $region16: #{tpu_custom_call.1} parent=0 // pred_region
    _
  $region17: #{tpu_custom_call.1} parent=0 // pred_fallthru
    _
  // Predicated region
  $region18: #{tpu_custom_call.1} parent=0 // pred_check
    _
  $region19: #{tpu_custom_call.1} parent=0 // pred_check_branch
    %21 = sbr.rel (0) target = $region21
  $region20: #{tpu_custom_call.1} parent=0 // pred_region
    _
  $region21: #{tpu_custom_call.1} parent=0 // pred_fallthru
    _
  // Predicated region
  $region22: #{tpu_custom_call.1} parent=0 // pred_check
    _
  $region23: #{tpu_custom_call.1} parent=0 // pred_check_branch
    %23 = sbr.rel (0) target = $region25
  $region24: #{tpu_custom_call.1} parent=0 // pred_region
    _
  $region25: #{tpu_custom_call.1} parent=0 // pred_fallthru
    _
  // Predicated region
  $region26: #{tpu_custom_call.1} parent=0 // pred_check
    _
  $region27: #{tpu_custom_call.1} parent=0 // pred_check_branch
    %25 = sbr.rel (0) target = $region29
  $region28: #{tpu_custom_call.1} parent=0 // pred_region
    _
  $region29: #{tpu_custom_call.1} parent=0 // pred_fallthru
    _
  %v26 = vld [vmem:[%s0] sm:$0xff]
  %v27 = vld [vmem:[%s1] sm:$0xff]
  %v28 = vld [vmem:[%s1 + $0x8] sm:$0xff]
  %v29 = vld [vmem:[%s2] sm:$0x1]
  %v31 = vlaneseq
  %v32 = vshrl.u32 %v31, 7
  %v33 = vsub.s32 0, %v32
  %v34 = vrot.slane %v29, %v33
  %vm36 = vcmask 130048
  %v38 = vsel %vm36, %v26, 0
  %40 = vmatprep.subr.mxu0 0.0
  %41 = vmatpush1.msra.mxu0 %v27
  %42 = vmatprep.subr.mxu0 0.0
  %43 = vmatpush1.msra.mxu0 %v28
  %44 = vmatprep.subr.mxu0 0.0
  %45 = vmatpush1.msra.mxu0 0.0
  %46 = vmatprep.subr.mxu0 0.0
  %47 = vmatpush1.msra.mxu0 0.0
  %48 = vmatprep.subr.mxu0 0.0
  %49 = vmatpush1.msra.mxu0 0.0
  %50 = vmatprep.subr.mxu0 0.0
  %51 = vmatpush1.msra.mxu0 0.0
  %52 = vmatprep.subr.mxu0 0.0
  %53 = vmatpush1.msra.mxu0 0.0
  %54 = vmatprep.subr.mxu0 0.0
  %55 = vmatpush1.msra.mxu0 0.0
  %56 = vmatprep.subr.mxu0 0.0
  %57 = vmatpush1.msra.mxu0 0.0
  %58 = vmatprep.subr.mxu0 0.0
  %59 = vmatpush1.msra.mxu0 0.0
  %60 = vmatprep.subr.mxu0 0.0
  %61 = vmatpush1.msra.mxu0 0.0
  %62 = vmatprep.subr.mxu0 0.0
  %63 = vmatpush1.msra.mxu0 0.0
  %64 = vmatprep.subr.mxu0 0.0
  %65 = vmatpush1.msra.mxu0 0.0
  %66 = vmatprep.subr.mxu0 0.0
  %67 = vmatpush1.msra.mxu0 0.0
  %68 = vmatprep.subr.mxu0 0.0
  %69 = vmatpush1.msra.mxu0 0.0
  %70 = vmatprep.subr.mxu0 0.0
  %71 = vmatpush1.msra.mxu0 0.0
  %72 = vmatprep.subr.mxu0 0.0
  %73 = vmatpush1.msra.mxu0 0.0
  %74 = vmatprep.subr.mxu0 0.0
  %75 = vmatpush1.msra.mxu0 0.0
  %76 = vmatprep.subr.mxu0 0.0
  %77 = vmatpush1.msra.mxu0 0.0
  %78 = vmatprep.subr.mxu0 0.0
  %79 = vmatpush1.msra.mxu0 0.0
  %80 = vmatprep.subr.mxu0 0.0
  %81 = vmatpush1.msra.mxu0 0.0
  %82 = vmatprep.subr.mxu0 0.0
  %83 = vmatpush1.msra.mxu0 0.0
  %84 = vmatprep.subr.mxu0 0.0
  %85 = vmatpush1.msra.mxu0 0.0
  %86 = vmatprep.subr.mxu0 0.0
  %87 = vmatpush1.msra.mxu0 0.0
  %88 = vmatprep.subr.mxu0 0.0
  %89 = vmatpush1.msra.mxu0 0.0
  %90 = vmatprep.subr.mxu0 0.0
  %91 = vmatpush1.msra.mxu0 0.0
  %92 = vmatprep.subr.mxu0 0.0
  %93 = vmatpush1.msra.mxu0 0.0
  %94 = vmatprep.subr.mxu0 0.0
  %95 = vmatpush1.msra.mxu0 0.0
  %96 = vmatprep.subr.mxu0 0.0
  %97 = vmatpush1.msra.mxu0 0.0
  %98 = vmatprep.subr.mxu0 0.0
  %99 = vmatpush1.msra.mxu0 0.0
  %100 = vmatprep.subr.mxu0 0.0
  %101 = vmatpush1.msra.mxu0 0.0
  %102 = vmatprep.subr.mxu0 0.0
  %103 = vmatpush1.msra.mxu0 0.0
  %104 = vmatprep.mubr.f32.mxu0 0.0
  %105 = vmatmul.mubr.f32.gmra.mrb[0].mxu0 %v38
  %v106 = vpop.f32.mrb[0].mxu0
  %v107 = vadd.f32 %v34, %v106
  %v108 = vpop.f32.mrb[0].mxu0
  %109 = vdwg.mxu0
  %v110 = vmax.f32 %v107, 0.0
  %v111 = vld [vmem:[%s3] sm:$0xff]
  %v112 = vld [vmem:[%s3 + $0x8] sm:$0xff]
  %v113 = vld [vmem:[%s3 + $0x10] sm:$0xff]
  %v114 = vld [vmem:[%s3 + $0x18] sm:$0xff]
  %v115 = vld [vmem:[%s4] sm:$0x1]
  %v117 = vlaneseq
  %v118 = vshrl.u32 %v117, 7
  %v119 = vsub.s32 0, %v118
  %v120 = vrot.slane %v115, %v119
  %vm122 = vcmask 261120
  %v124 = vsel %vm122, %v110, 0
  %126 = vmatprep.subr.mxu0 0.0
  %127 = vmatpush1.msra.mxu0 %v111
  %128 = vmatprep.subr.mxu0 0.0
  %129 = vmatpush1.msra.mxu0 %v112
  %130 = vmatprep.subr.mxu0 0.0
  %131 = vmatpush1.msra.mxu0 %v113
  %132 = vmatprep.subr.mxu0 0.0
  %133 = vmatpush1.msra.mxu0 %v114
  %134 = vmatprep.subr.mxu0 0.0
  %135 = vmatpush1.msra.mxu0 0.0
  %136 = vmatprep.subr.mxu0 0.0
  %137 = vmatpush1.msra.mxu0 0.0
  %138 = vmatprep.subr.mxu0 0.0
  %139 = vmatpush1.msra.mxu0 0.0
  %140 = vmatprep.subr.mxu0 0.0
  %141 = vmatpush1.msra.mxu0 0.0
  %142 = vmatprep.subr.mxu0 0.0
  %143 = vmatpush1.msra.mxu0 0.0
  %144 = vmatprep.subr.mxu0 0.0
  %145 = vmatpush1.msra.mxu0 0.0
  %146 = vmatprep.subr.mxu0 0.0
  %147 = vmatpush1.msra.mxu0 0.0
  %148 = vmatprep.subr.mxu0 0.0
  %149 = vmatpush1.msra.mxu0 0.0
  %150 = vmatprep.subr.mxu0 0.0
  %151 = vmatpush1.msra.mxu0 0.0
  %152 = vmatprep.subr.mxu0 0.0
  %153 = vmatpush1.msra.mxu0 0.0
  %154 = vmatprep.subr.mxu0 0.0
  %155 = vmatpush1.msra.mxu0 0.0
  %156 = vmatprep.subr.mxu0 0.0
  %157 = vmatpush1.msra.mxu0 0.0
  %158 = vmatprep.subr.mxu0 0.0
  %159 = vmatpush1.msra.mxu0 0.0
  %160 = vmatprep.subr.mxu0 0.0
  %161 = vmatpush1.msra.mxu0 0.0
  %162 = vmatprep.subr.mxu0 0.0
  %163 = vmatpush1.msra.mxu0 0.0
  %164 = vmatprep.subr.mxu0 0.0
  %165 = vmatpush1.msra.mxu0 0.0
  %166 = vmatprep.subr.mxu0 0.0
  %167 = vmatpush1.msra.mxu0 0.0
  %168 = vmatprep.subr.mxu0 0.0
  %169 = vmatpush1.msra.mxu0 0.0
  %170 = vmatprep.subr.mxu0 0.0
  %171 = vmatpush1.msra.mxu0 0.0
  %172 = vmatprep.subr.mxu0 0.0
  %173 = vmatpush1.msra.mxu0 0.0
  %174 = vmatprep.subr.mxu0 0.0
  %175 = vmatpush1.msra.mxu0 0.0
  %176 = vmatprep.subr.mxu0 0.0
  %177 = vmatpush1.msra.mxu0 0.0
  %178 = vmatprep.subr.mxu0 0.0
  %179 = vmatpush1.msra.mxu0 0.0
  %180 = vmatprep.subr.mxu0 0.0
  %181 = vmatpush1.msra.mxu0 0.0
  %182 = vmatprep.subr.mxu0 0.0
  %183 = vmatpush1.msra.mxu0 0.0
  %184 = vmatprep.subr.mxu0 0.0
  %185 = vmatpush1.msra.mxu0 0.0
  %186 = vmatprep.subr.mxu0 0.0
  %187 = vmatpush1.msra.mxu0 0.0
  %188 = vmatprep.subr.mxu0 0.0
  %189 = vmatpush1.msra.mxu0 0.0
  %190 = vmatprep.mubr.f32.mxu0 0.0
  %191 = vmatmul.mubr.f32.gmra.mrb[0].mxu0 %v124
  %v192 = vpop.f32.mrb[0].mxu0
  %v193 = vadd.f32 %v120, %v192
  %v194 = vpop.f32.mrb[0].mxu0
  %195 = vdwg.mxu0
  %v196 = vxor.u32 %v193, 2147483648
  %v197 = vmul.f32 %v196, 1.442695
  %v198 = vpow.pop %v197
  %v199 = vadd.f32 %v198, 1.0
  %v200 = vrcp.pop %v199
  %v201 = vmul.f32 1.0, %v200
  %v202 = vld [vmem:[%s5] sm:$0xff]
  %v203 = vld [vmem:[%s5 + $0x8] sm:$0xff]
  %v204 = vld [vmem:[%s6] sm:$0x1]
  %v206 = vlaneseq
  %v207 = vshrl.u32 %v206, 7
  %v208 = vsub.s32 0, %v207
  %v209 = vrot.slane %v204, %v208
  %v212 = vsel %vm36, %v201, 0
  %214 = vmatprep.subr.mxu0 0.0
  %215 = vmatpush1.msra.mxu0 %v202
  %216 = vmatprep.subr.mxu0 0.0
  %217 = vmatpush1.msra.mxu0 %v203
  %218 = vmatprep.subr.mxu0 0.0
  %219 = vmatpush1.msra.mxu0 0.0
  %220 = vmatprep.subr.mxu0 0.0
  %221 = vmatpush1.msra.mxu0 0.0
  %222 = vmatprep.subr.mxu0 0.0
  %223 = vmatpush1.msra.mxu0 0.0
  %224 = vmatprep.subr.mxu0 0.0
  %225 = vmatpush1.msra.mxu0 0.0
  %226 = vmatprep.subr.mxu0 0.0
  %227 = vmatpush1.msra.mxu0 0.0
  %228 = vmatprep.subr.mxu0 0.0
  %229 = vmatpush1.msra.mxu0 0.0
  %230 = vmatprep.subr.mxu0 0.0
  %231 = vmatpush1.msra.mxu0 0.0
  %232 = vmatprep.subr.mxu0 0.0
  %233 = vmatpush1.msra.mxu0 0.0
  %234 = vmatprep.subr.mxu0 0.0
  %235 = vmatpush1.msra.mxu0 0.0
  %236 = vmatprep.subr.mxu0 0.0
  %237 = vmatpush1.msra.mxu0 0.0
  %238 = vmatprep.subr.mxu0 0.0
  %239 = vmatpush1.msra.mxu0 0.0
  %240 = vmatprep.subr.mxu0 0.0
  %241 = vmatpush1.msra.mxu0 0.0
  %242 = vmatprep.subr.mxu0 0.0
  %243 = vmatpush1.msra.mxu0 0.0
  %244 = vmatprep.subr.mxu0 0.0
  %245 = vmatpush1.msra.mxu0 0.0
  %246 = vmatprep.subr.mxu0 0.0
  %247 = vmatpush1.msra.mxu0 0.0
  %248 = vmatprep.subr.mxu0 0.0
  %249 = vmatpush1.msra.mxu0 0.0
  %250 = vmatprep.subr.mxu0 0.0
  %251 = vmatpush1.msra.mxu0 0.0
  %252 = vmatprep.subr.mxu0 0.0
  %253 = vmatpush1.msra.mxu0 0.0
  %254 = vmatprep.subr.mxu0 0.0
  %255 = vmatpush1.msra.mxu0 0.0
  %256 = vmatprep.subr.mxu0 0.0
  %257 = vmatpush1.msra.mxu0 0.0
  %258 = vmatprep.subr.mxu0 0.0
  %259 = vmatpush1.msra.mxu0 0.0
  %260 = vmatprep.subr.mxu0 0.0
  %261 = vmatpush1.msra.mxu0 0.0
  %262 = vmatprep.subr.mxu0 0.0
  %263 = vmatpush1.msra.mxu0 0.0
  %264 = vmatprep.subr.mxu0 0.0
  %265 = vmatpush1.msra.mxu0 0.0
  %266 = vmatprep.subr.mxu0 0.0
  %267 = vmatpush1.msra.mxu0 0.0
  %268 = vmatprep.subr.mxu0 0.0
  %269 = vmatpush1.msra.mxu0 0.0
  %270 = vmatprep.subr.mxu0 0.0
  %271 = vmatpush1.msra.mxu0 0.0
  %272 = vmatprep.subr.mxu0 0.0
  %273 = vmatpush1.msra.mxu0 0.0
  %274 = vmatprep.subr.mxu0 0.0
  %275 = vmatpush1.msra.mxu0 0.0
  %276 = vmatprep.subr.mxu0 0.0
  %277 = vmatpush1.msra.mxu0 0.0
  %278 = vmatprep.mubr.f32.mxu0 0.0
  %279 = vmatmul.mubr.f32.gmra.mrb[0].mxu0 %v212
  %v280 = vpop.f32.mrb[0].mxu0
  %v281 = vadd.f32 %v209, %v280
  %v282 = vpop.f32.mrb[0].mxu0
  %283 = vdwg.mxu0
  %vm284 = vcmask 31744
  %285 = vst.msk [vmem:[%s7] sm:$0xff] %vm284, %v281
  // Predicated region
  $region30: #{tpu_custom_call.1} parent=0 // pred_check
    _
  $region31: #{tpu_custom_call.1} parent=0 // pred_check_branch
    %287 = sbr.rel (0) target = $region33
  $region32: #{tpu_custom_call.1} parent=0 // pred_region
    _
  $region33: #{tpu_custom_call.1} parent=0 // pred_fallthru
    _
  // Predicated region
  $region34: #{tpu_custom_call.1} parent=0 // pred_check
    _
  $region35: #{tpu_custom_call.1} parent=0 // pred_check_branch
    %289 = sbr.rel (0) target = $region37
  $region36: #{tpu_custom_call.1} parent=0 // pred_region
    _
  $region37: #{tpu_custom_call.1} parent=0 // pred_fallthru
    _

</llo_original>
